<compile_context>
chip_gen: v7x
topology: tpu7x:2x2x1
jax: 0.10.0
libtpu: 0.0.40
codegen_flags: <defaults>
</compile_context>

<pallas_src>
import math

import jax
import jax.numpy as jnp
from jax.experimental import pallas as pl
from jax.experimental.pallas import tpu as pltpu


# ---------------------------------------------------------------------------
# Pallas kernel: out = w0*face + w1*body + pe_mix      (pe_mix = w0*pe0+w1*pe1)
# ---------------------------------------------------------------------------
def _coeff_sum_kernel(w_ref, face_ref, body_ref, pe_ref, out_ref):
    # w_ref:    SMEM (2,) f32 softmax weights
    # face_ref / body_ref / out_ref: VMEM (tb, td) tiles
    # pe_ref:   VMEM (1, td) pre-mixed PE row, in the compute dtype
    cdt = pe_ref.dtype                      # bf16 for bf16 inputs, else f32
    w0 = w_ref[0].astype(cdt)
    w1 = w_ref[1].astype(cdt)
    acc = (w0 * face_ref[...].astype(cdt)
           + w1 * body_ref[...].astype(cdt)
           + pe_ref[...])
    out_ref[...] = acc.astype(out_ref.dtype)


# ---------------------------------------------------------------------------
# Tile-size / VMEM helpers
# ---------------------------------------------------------------------------
def _round_down(x, m):
    return (x // m) * m


def _sublane_multiple(dtype):
    size = jnp.dtype(dtype).itemsize
    if size >= 4:
        return 8
    if size == 2:
        return 16
    return 32


def _vmem_capacity_bytes():
    # Generation-aware budget (64 MiB per TC on v7x, 128 MiB on v5e/v6e).
    try:
        return int(pltpu.get_tpu_info().vmem_capacity_bytes)
    except Exception:  # pragma: no cover - conservative fallback (v7x per-TC)
        return 64 * 1024 * 1024


def _pick_tiles(B, D, itemsize, sub, vmem_cap):
    # Lane tile: keep the full feature dim unless it is very large.
    if D > 4096 and D % 512 == 0:
        td = 2048 if D % 2048 == 0 else (1024 if D % 1024 == 0 else 512)
    else:
        td = D
    # Per grid step the pipeline holds double-buffered face/body/out tiles.
    # Spend ~50% of VMEM on that (leave headroom for Mosaic scratch, esp. v7x).
    budget = int(vmem_cap * 0.5)
    per_row = 2 * 3 * td * itemsize
    tb_cap = max(sub, _round_down(budget // max(per_row, 1), sub))
    # ~512 rows is past the HBM-roofline knee; larger tiles cost VMEM for ~1%.
    tb_target = max(sub, min(tb_cap, 512))

    if B <= sub:
        return B, td                        # full-extent batch block (always legal)
    # Aim for >=4 batch-grid steps: pipelining overlap + v7x TC sharding.
    quarter = max(sub, _round_down(pl.cdiv(B, 4), sub))
    tb = min(tb_target, quarter)
    return tb, td


# ---------------------------------------------------------------------------
# Public wrapper
# ---------------------------------------------------------------------------
def coeff_sum_fusion(face, body, weights, pe, *, tb=None, td=None,
                     donate_face=False, use_pallas=None, compute_dtype=None):
    """face, body: (B, D); weights: (1, 2) raw params; pe: (2, D) f32 table."""
    B, D = face.shape
    assert body.shape == (B, D)
    assert pe.shape[0] >= 2 and pe.shape[1] == D

    in_dtype = face.dtype
    if compute_dtype is None:
        # v6e/v7x VALU is bf16-capable: compute natively, halving VPU work.
        compute_dtype = jnp.bfloat16 if in_dtype == jnp.bfloat16 else jnp.float32
        # TODO(synk): on v5e (no bf16 VALU) force compute_dtype=f32 for bf16 inputs.

    # Tiny parameter prep (glue): softmax over the 2 mixing coefficients and
    # fold the PE rows into a single vector:
    #   w0*(face+pe0) + w1*(body+pe1) == w0*face + w1*body + (w0*pe0 + w1*pe1)
    w = jax.nn.softmax(weights.astype(jnp.float32), axis=1).reshape(2)
    pe_mix = (w[0] * pe[0].astype(jnp.float32)
              + w[1] * pe[1].astype(jnp.float32)).reshape(1, D).astype(compute_dtype)

    itemsize = jnp.dtype(in_dtype).itemsize
    if use_pallas is None:
        # Below a few MiB of HBM traffic the pallas_call fixed overhead dominates.
        use_pallas = (3 * B * D * itemsize) >= (4 << 20)
    if not use_pallas:
        out = (w[0].astype(compute_dtype) * face.astype(compute_dtype)
               + w[1].astype(compute_dtype) * body.astype(compute_dtype) + pe_mix)
        return out.astype(in_dtype)

    # Lane-densify: if D is not a multiple of 128, view (B, D) as (B//k, k*D)
    # with k*D lane-aligned so stores avoid masked partial vst (layout only).
    k = 1
    if D % 128 != 0:
        for cand in (2, 4, 8, 16, 32, 64, 128):
            if B % cand == 0 and (cand * D) % 128 == 0:
                k = cand
                break
    if k > 1:
        face_in = face.reshape(B // k, k * D)
        body_in = body.reshape(B // k, k * D)
        pe_row = jnp.tile(pe_mix, (1, k))
        Bk, Dk = B // k, k * D
    else:
        face_in, body_in, pe_row = face, body, pe_mix
        Bk, Dk = B, D

    sub = _sublane_multiple(in_dtype)
    vmem_cap = _vmem_capacity_bytes()
    auto_tb, auto_td = _pick_tiles(Bk, Dk, itemsize, sub, vmem_cap)
    if tb is None:
        tb = auto_tb
    if td is None:
        td = auto_td
    tb = min(tb, Bk)
    td = min(td, Dk)
    assert tb == Bk or tb % sub == 0, "batch tile must respect the sublane quantum"
    assert td == Dk or (Dk % td == 0 and td % 128 == 0), "lane tile must be 128-aligned"

    nb = pl.cdiv(Bk, tb)        # ragged batch: partial last block, no padding copies
    nd = Dk // td

    # Raise the scoped VMEM limit to cover the double-buffered tiles (v5e default
    # is 16 MiB), capped at 75% of physical per-TC VMEM (64 MiB on v7x).
    need = 2 * (3 * tb * td * itemsize + td * jnp.dtype(compute_dtype).itemsize)
    vmem_limit = int(min(vmem_cap * 0.75, max(need * 1.5, 32 * 1024 * 1024)))

    extra = {}
    if donate_face and k == 1:
        # args are (w, face, body, pe_row): alias the face buffer onto the output.
        # Only use when the caller no longer needs `face`.
        extra["input_output_aliases"] = {1: 0}

    if nd == 1:
        grid = (nb,)
        in_specs = [
            pl.BlockSpec(memory_space=pltpu.SMEM),              # w (2,) f32 scalars
            pl.BlockSpec((tb, td), lambda i: (i, 0)),           # face tile
            pl.BlockSpec((tb, td), lambda i: (i, 0)),           # body tile
            pl.BlockSpec((1, td), lambda i: (0, 0)),            # resident PE row
        ]
        out_specs = pl.BlockSpec((tb, td), lambda i: (i, 0))
        dims = ("parallel",)
    else:
        # D axis outermost so the tiny PE block only re-DMAs when j changes.
        grid = (nd, nb)
        in_specs = [
            pl.BlockSpec(memory_space=pltpu.SMEM),
            pl.BlockSpec((tb, td), lambda j, i: (i, j)),
            pl.BlockSpec((tb, td), lambda j, i: (i, j)),
            pl.BlockSpec((1, td), lambda j, i: (0, j)),
        ]
        out_specs = pl.BlockSpec((tb, td), lambda j, i: (i, j))
        dims = ("parallel", "parallel")

    out = pl.pallas_call(
        _coeff_sum_kernel,
        out_shape=jax.ShapeDtypeStruct((Bk, Dk), in_dtype),
        grid_spec=pltpu.PrefetchScalarGridSpec(
            num_scalar_prefetch=0,
            grid=grid,
            in_specs=in_specs,
            out_specs=out_specs,
        ),
        compiler_params=pltpu.CompilerParams(
            dimension_semantics=dims,
            vmem_limit_bytes=vmem_limit),
        **extra,
    )(w, face_in, body_in, pe_row)

    return out.reshape(B, D) if k > 1 else out


# ---------------------------------------------------------------------------
# Parameter / buffer construction (deterministic, matches nn.Module.__init__)
# ---------------------------------------------------------------------------
def init_weights(key):
    # nn.init.xavier_uniform_ on a (1, 2) tensor: bound = sqrt(6 / (fan_in+fan_out))
    bound = math.sqrt(6.0 / (1 + 2))
    return jax.random.uniform(key, (1, 2), jnp.float32, -bound, bound)


def make_positional_encoding(dim_model, max_len=2):
    # Standard sinusoidal PE (PositionalEncoding(dim_model, dropout_p=0, max_len=2)).
    assert dim_model % 2 == 0, "sinusoidal PE requires an even feature dim"
    pos = jnp.arange(max_len, dtype=jnp.float32)[:, None]                  # (L, 1)
    div = jnp.exp(jnp.arange(0, dim_model, 2, dtype=jnp.float32)
                  * (-math.log(10000.0) / dim_model))                      # (D/2,)
    pe = jnp.zeros((max_len, dim_model), jnp.float32)
    pe = pe.at[:, 0::2].set(jnp.sin(pos * div))
    pe = pe.at[:, 1::2].set(jnp.cos(pos * div))
    return pe                                                              # (2, D)


# ---------------------------------------------------------------------------
# Reference (plain JAX) for sanity checking
# ---------------------------------------------------------------------------
def reference(face, body, weights, pe):
    w = jax.nn.softmax(weights.astype(jnp.float32), axis=1)
    return (w[0, 0] * (face.astype(jnp.float32) + pe[0])
            + w[0, 1] * (body.astype(jnp.float32) + pe[1])).astype(face.dtype)


if __name__ == "__main__":
    key = jax.random.PRNGKey(0)
    k_w, k_f1, k_b1, k_f2, k_b2, k_f3, k_b3, k_f4, k_b4 = jax.random.split(key, 9)

    weights = init_weights(k_w)                                   # (1, 2) param

    # ---- case 1: small, lane-aligned (B=8, D=128), f32, force Pallas path ----
    B, D = 8, 128
    pe = make_positional_encoding(D, max_len=2)                   # (2, D) buffer
    face = jax.random.normal(k_f1, (B, D), jnp.float32)
    body = jax.random.normal(k_b1, (B, D), jnp.float32)
    out = jax.block_until_ready(coeff_sum_fusion(face, body, weights, pe,
                                                 use_pallas=True))
    ref = reference(face, body, weights, pe)
    assert out.shape == (B, D)
    assert jnp.allclose(out, ref, atol=1e-5, rtol=1e-5), "mismatch (case 1)"

    # ---- case 2: ragged batch (B=40, tb=16) -> cdiv grid, partial last block ----
    B2 = 40
    face2 = jax.random.normal(k_f2, (B2, D), jnp.float32)
    body2 = jax.random.normal(k_b2, (B2, D), jnp.float32)
    out2 = jax.block_until_ready(coeff_sum_fusion(face2, body2, weights, pe,
                                                  tb=16, use_pallas=True))
    ref2 = reference(face2, body2, weights, pe)
    assert out2.shape == (B2, D)
    assert jnp.allclose(out2, ref2, atol=1e-5, rtol=1e-5), "mismatch (case 2)"

    # ---- case 3: bf16 inputs (B=64, D=256) -> native bf16 compute, 4 grid steps ----
    B3, D3 = 64, 256
    pe3 = make_positional_encoding(D3, max_len=2)
    face3 = jax.random.normal(k_f3, (B3, D3), jnp.bfloat16)
    body3 = jax.random.normal(k_b3, (B3, D3), jnp.bfloat16)
    out3 = jax.block_until_ready(coeff_sum_fusion(face3, body3, weights, pe3,
                                                  use_pallas=True))
    ref3 = reference(face3, body3, weights, pe3)
    assert out3.shape == (B3, D3)
    assert jnp.allclose(out3.astype(jnp.float32), ref3.astype(jnp.float32),
                        atol=5e-2, rtol=5e-2), "mismatch (case 3)"

    # ---- case 4: lane-sparse feature dim (B=8, D=96) -> lane-dense reshape path ----
    B4, D4 = 8, 96
    pe4 = make_positional_encoding(D4, max_len=2)
    face4 = jax.random.normal(k_f4, (B4, D4), jnp.float32)
    body4 = jax.random.normal(k_b4, (B4, D4), jnp.float32)
    out4 = jax.block_until_ready(coeff_sum_fusion(face4, body4, weights, pe4,
                                                  use_pallas=True))
    ref4 = reference(face4, body4, weights, pe4)
    assert out4.shape == (B4, D4)
    assert jnp.allclose(out4, ref4, atol=1e-5, rtol=1e-5), "mismatch (case 4)"

    print("KERNEL_OK")
</pallas_src>

<mosaic_0001>
module attributes {stable_mosaic.version = 11 : i64} {
  func.func @_coeff_sum_kernel(%arg0: i32, %arg1: memref<2xf32, #tpu.memory_space<smem>>, %arg2: memref<8x128xf32, #tpu.memory_space<vmem>>, %arg3: memref<8x128xf32, #tpu.memory_space<vmem>>, %arg4: memref<1x128xf32, #tpu.memory_space<vmem>>, %arg5: memref<8x128xf32, #tpu.memory_space<vmem>>) attributes {dimension_semantics = [#tpu.dimension_semantics<parallel>], iteration_bounds = array<i64: 1>, scalar_prefetch = 0 : i64, scratch_operands = 0 : i64, tpu.core_type = #tpu.core_type<tc>, window_params = [{transform_indices = @transform_0, window_bounds = array<i64: 2>}, {transform_indices = @transform_1, window_bounds = array<i64: 8, 128>}, {transform_indices = @transform_2, window_bounds = array<i64: 8, 128>}, {pipeline_mode = #tpu.pipeline_mode<synchronous>, transform_indices = @transform_3, window_bounds = array<i64: 1, 128>}, {transform_indices = @transform_4, window_bounds = array<i64: 8, 128>}]} {
    %c0 = arith.constant 0 : index
    %0 = memref.load %arg1[%c0] : memref<2xf32, #tpu.memory_space<smem>>
    %c1 = arith.constant 1 : index
    %1 = memref.load %arg1[%c1] : memref<2xf32, #tpu.memory_space<smem>>
    %c0_0 = arith.constant 0 : index
    %c0_1 = arith.constant 0 : index
    %2 = vector.load %arg2[%c0_0, %c0_1] : memref<8x128xf32, #tpu.memory_space<vmem>>, vector<8x128xf32>
    %3 = vector.broadcast %0 : f32 to vector<8x128xf32>
    %4 = arith.mulf %3, %2 : vector<8x128xf32>
    %c0_2 = arith.constant 0 : index
    %c0_3 = arith.constant 0 : index
    %5 = vector.load %arg3[%c0_2, %c0_3] : memref<8x128xf32, #tpu.memory_space<vmem>>, vector<8x128xf32>
    %6 = vector.broadcast %1 : f32 to vector<8x128xf32>
    %7 = arith.mulf %6, %5 : vector<8x128xf32>
    %8 = arith.addf %4, %7 : vector<8x128xf32>
    %c0_4 = arith.constant 0 : index
    %c0_5 = arith.constant 0 : index
    %9 = vector.load %arg4[%c0_4, %c0_5] : memref<1x128xf32, #tpu.memory_space<vmem>>, vector<1x128xf32>
    %10 = vector.broadcast %9 : vector<1x128xf32> to vector<8x128xf32>
    %11 = arith.addf %8, %10 : vector<8x128xf32>
    %c0_6 = arith.constant 0 : index
    %c0_7 = arith.constant 0 : index
    %12 = vector.load %arg5[%c0_6, %c0_7] : memref<8x128xf32, #tpu.memory_space<vmem>>, vector<8x128xf32>
    tpu.vector_store %arg5[%c0_6, %c0_7], %11 {strides = array<i32>} : memref<8x128xf32, #tpu.memory_space<vmem>>, vector<8x128xf32>,
    return
  }
  func.func @transform_0(%arg0: i32) -> i32 {
    %c0_i32 = arith.constant 0 : i32
    %c0_i32_0 = arith.constant 0 : i32
    return %c0_i32 : i32
  }
  func.func @transform_1(%arg0: i32) -> (i32, i32) {
    %c0_i32 = arith.constant 0 : i32
    %c0_i32_0 = arith.constant 0 : i32
    return %arg0, %c0_i32 : i32, i32
  }
  func.func @transform_2(%arg0: i32) -> (i32, i32) {
    %c0_i32 = arith.constant 0 : i32
    %c0_i32_0 = arith.constant 0 : i32
    return %arg0, %c0_i32 : i32, i32
  }
  func.func @transform_3(%arg0: i32) -> (i32, i32) {
    %c0_i32 = arith.constant 0 : i32
    %c0_i32_0 = arith.constant 0 : i32
    %c0_i32_1 = arith.constant 0 : i32
    return %c0_i32, %c0_i32_0 : i32, i32
  }
  func.func @transform_4(%arg0: i32) -> (i32, i32) {
    %c0_i32 = arith.constant 0 : i32
    %c0_i32_0 = arith.constant 0 : i32
    return %arg0, %c0_i32 : i32, i32
  }
}

</mosaic_0001>

<llo_original>
// kernel: tpu_custom_call.1
$region0: #{tpu_custom_call.1}
  #allocation0 [shape = 'u32[]', space=smem, size = 0x4, offset = 0x4, fixed_abs, tag = 'smem constant byte address 0x4 - core index']
  #allocation1 [shape = 'u32[144,128]{1,0:T(1,128)}', space=vmem, size = 0x12000, scoped, tag = 'internal scratch']
  %s0 = inlined_call_operand.hbm [shape: f32[2], index: 0, kind: input, shape index: {}]
  %s1 = inlined_call_operand.hbm [shape: f32[8,128], index: 1, kind: input, shape index: {}]
  %s2 = inlined_call_operand.hbm [shape: f32[8,128], index: 2, kind: input, shape index: {}]
  %s3 = inlined_call_operand.vmem [shape: f32[1,128], index: 3, kind: input, shape index: {}]
  %s4 = inlined_call_operand.hbm [shape: f32[8,128], index: 4, kind: output, shape index: {}]
  %s5 = sld [smem:[#allocation0]]
  $region38: #{tpu_custom_call.1} parent=0
    _
  %s7 = ssub.s32 1, %s5
  %s8 = scalar_select 0, %s7, %s5
  $region1: #{tpu_custom_call.1} parent=0
    #allocation2 [shape = 'u8[512]{0}', space=smem, size = 0x200, scoped, tag = 'input window, operand 0, single buffered']
    #allocation3 [shape = 's32[1]{0}', space=sflag, size = 0x4, scoped, tag = 'scoped memory for tpu_custom_call.1']
    #allocation4 [shape = 's32[1]{0}', space=sflag, size = 0x4, scoped, tag = 'scoped memory for tpu_custom_call.1']
    #allocation5 [shape = 's32[1]{0}', space=sflag, size = 0x4, scoped, tag = 'scoped memory for tpu_custom_call.1']
    #allocation6 [shape = 'u8[4096]{0}', space=vmem, size = 0x1000, scoped, tag = 'input window, operand 1, single buffered']
    #allocation7 [shape = 'u8[4096]{0}', space=vmem, size = 0x1000, scoped, tag = 'input window, operand 2, single buffered']
    #allocation8 [shape = 's32[1]{0}', space=sflag, size = 0x4, scoped, tag = 'scoped memory for tpu_custom_call.1']
    #allocation9 [shape = 'u8[4096]{0}', space=vmem, size = 0x1000, scoped, tag = 'output window, operand 0, single buffered']
    %9 = vsyncpa [#allocation5], 0
    %10 = vsyncpa [#allocation3], 0
    %11 = vsyncpa [#allocation8], 0
    %12 = vsyncpa [#allocation4], 0
    // Predicated region
    $region2: #{tpu_custom_call.1} parent=1 // pred_check
      _
    $region3: #{tpu_custom_call.1} parent=1 // pred_check_branch
      %14 = sbr.rel (0) target = $region5
    $region4: #{tpu_custom_call.1} parent=1 // pred_region
      %s16 = ssub.s32 16, 16
      %17 = vsyncadd [#allocation5], %s16
      %20 = dma.hbm_to_smem %s0, 16, [#allocation2], [#allocation5]
    $region5: #{tpu_custom_call.1} parent=1 // pred_fallthru
      _
    // Predicated region
    $region6: #{tpu_custom_call.1} parent=1 // pred_check
      _
    $region7: #{tpu_custom_call.1} parent=1 // pred_check_branch
      %22 = sbr.rel (0) target = $region9
    $region8: #{tpu_custom_call.1} parent=1 // pred_region
      %s24 = ssub.s32 128, 128
      %25 = vsyncadd [#allocation3], %s24
      %s27 = sshll.u32 [#allocation6], 4
      %s28 = int_to_ptr.vmem [resolvable:$true] %s27
      %30 = dma.hbm_to_vmem [thread:$0]  %s1, 128, %s28, [#allocation3]
    $region9: #{tpu_custom_call.1} parent=1 // pred_fallthru
      _
    // Predicated region
    $region10: #{tpu_custom_call.1} parent=1 // pred_check
      _
    $region11: #{tpu_custom_call.1} parent=1 // pred_check_branch
      %32 = sbr.rel (0) target = $region13
    $region12: #{tpu_custom_call.1} parent=1 // pred_region
      %s34 = ssub.s32 128, 128
      %35 = vsyncadd [#allocation8], %s34
      %s37 = sshll.u32 [#allocation7], 4
      %s38 = int_to_ptr.vmem [resolvable:$true] %s37
      %40 = dma.hbm_to_vmem [thread:$0]  %s2, 128, %s38, [#allocation8]
    $region13: #{tpu_custom_call.1} parent=1 // pred_fallthru
      _
    // Predicated region
    $region14: #{tpu_custom_call.1} parent=1 // pred_check
      _
    $region15: #{tpu_custom_call.1} parent=1 // pred_check_branch
      %42 = sbr.rel (0) target = $region17
    $region16: #{tpu_custom_call.1} parent=1 // pred_region
      _
    $region17: #{tpu_custom_call.1} parent=1 // pred_fallthru
      _
    // Predicated region
    $region18: #{tpu_custom_call.1} parent=1 // pred_check
      _
    $region19: #{tpu_custom_call.1} parent=1 // pred_check_branch
      %44 = sbr.rel (0) target = $region21
    $region20: #{tpu_custom_call.1} parent=1 // pred_region
      %45 = dma.done [#allocation5], 16
    $region21: #{tpu_custom_call.1} parent=1 // pred_fallthru
      _
    // Predicated region
    $region22: #{tpu_custom_call.1} parent=1 // pred_check
      _
    $region23: #{tpu_custom_call.1} parent=1 // pred_check_branch
      %47 = sbr.rel (0) target = $region25
    $region24: #{tpu_custom_call.1} parent=1 // pred_region
      %48 = dma.done [#allocation3], 128
    $region25: #{tpu_custom_call.1} parent=1 // pred_fallthru
      _
    // Predicated region
    $region26: #{tpu_custom_call.1} parent=1 // pred_check
      _
    $region27: #{tpu_custom_call.1} parent=1 // pred_check_branch
      %50 = sbr.rel (0) target = $region29
    $region28: #{tpu_custom_call.1} parent=1 // pred_region
      %51 = dma.done [#allocation8], 128
    $region29: #{tpu_custom_call.1} parent=1 // pred_fallthru
      _
    %52 = sfence
    %s53 = sld [smem:[#allocation2]]
    %s54 = sld [smem:[#allocation2 + $0x1]]
    %v55 = vld [vmem:[#allocation6] sm:$0xff]
    %v56 = vstv %s53
    %v57 = vmul.f32 %v56, %v55
    %v58 = vld [vmem:[#allocation7] sm:$0xff]
    %v59 = vstv %s54
    %v60 = vmul.f32 %v59, %v58
    %v61 = vadd.f32 %v57, %v60
    %v62 = vld [vmem:[%s3] sm:$0x1]
    %v64 = vlaneseq
    %v65 = vshrl.u32 %v64, 7
    %v66 = vsub.s32 0, %v65
    %v67 = vrot.slane %v62, %v66
    %v69 = vadd.f32 %v61, %v67
    %70 = vst [vmem:[#allocation9] sm:$0xff] %v69
    // Predicated region
    $region30: #{tpu_custom_call.1} parent=1 // pred_check
      _
    $region31: #{tpu_custom_call.1} parent=1 // pred_check_branch
      %72 = sbr.rel (0) target = $region33
    $region32: #{tpu_custom_call.1} parent=1 // pred_region
      %s74 = ssub.s32 128, 128
      %75 = vsyncadd [#allocation4], %s74
      %s77 = sshll.u32 [#allocation9], 4
      %s78 = int_to_ptr.vmem [resolvable:$true] %s77
      %80 = dma.vmem_to_hbm [thread:$0]  %s78, 128, %s4, [#allocation4]
    $region33: #{tpu_custom_call.1} parent=1 // pred_fallthru
      _
    // Predicated region
    $region34: #{tpu_custom_call.1} parent=1 // pred_check
      _
    $region35: #{tpu_custom_call.1} parent=1 // pred_check_branch
      %82 = sbr.rel (0) target = $region37
    $region36: #{tpu_custom_call.1} parent=1 // pred_region
      %83 = dma.done [#allocation4], 128
    $region37: #{tpu_custom_call.1} parent=1 // pred_fallthru
      _
    %84 = vsyncpa [#allocation3], 1
    %85 = vsyncpa [#allocation8], 1
    %86 = vsyncpa [#allocation4], 1
    %87 = vsyncpa [#allocation5], 1

</llo_original>
